<compile_context>
chip_gen: v7x
topology: tpu7x:2x2x1
jax: 0.10.0
libtpu: 0.0.40
codegen_flags: <defaults>
</compile_context>

<pallas_src>
import jax
import jax.numpy as jnp
from jax import lax
from jax.experimental import pallas as pl
from jax.experimental.pallas import tpu as pltpu


# ----------------------------------------------------------------------------
# Host-side helper: fused "bilinear x2 (align_corners=True) + zero pad" as a
# single (H1*W1, H2*W2) linear operator (applied by one MXU matmul in-kernel).
# ----------------------------------------------------------------------------
def _interp_rows(in_sz, up_sz):
    # (up_sz, in_sz) bilinear weights, align_corners=True.
    if in_sz == 1:
        return jnp.ones((up_sz, 1), jnp.float32)
    pos = jnp.arange(up_sz, dtype=jnp.float32) * (in_sz - 1) / (up_sz - 1)
    lo = jnp.floor(pos).astype(jnp.int32)
    hi = jnp.minimum(lo + 1, in_sz - 1)
    frac = pos - lo.astype(jnp.float32)
    return (jax.nn.one_hot(lo, in_sz, dtype=jnp.float32) * (1.0 - frac)[:, None]
            + jax.nn.one_hot(hi, in_sz, dtype=jnp.float32) * frac[:, None])


def upsample_pad_operator(h1, w1, h2, w2):
    # Assumes h2 >= 2*h1 and w2 >= 2*w1 (standard UNet skip sizes).
    hu, wu = 2 * h1, 2 * w1
    dy, dx = h2 - hu, w2 - wu
    ah = jnp.zeros((h2, h1), jnp.float32).at[dy // 2:dy // 2 + hu].set(
        _interp_rows(h1, hu))
    aw = jnp.zeros((w2, w1), jnp.float32).at[dx // 2:dx // 2 + wu].set(
        _interp_rows(w1, wu))
    # M[(h1_, w1_), (h2_, w2_)] = ah[h2_, h1_] * aw[w2_, w1_]
    return jnp.einsum("oh,pw->hwop", ah, aw).reshape(h1 * w1, h2 * w2)


# ----------------------------------------------------------------------------
# Parameters (deterministic, synthetic).  Conv weights are packed to
# (Cout, 9*Cin) bf16 for the in-kernel im2col matmul; the eval-mode BatchNorm
# scale is folded into the packed weights and (with the conv bias) into a
# per-channel shift.
# ----------------------------------------------------------------------------
def init_up_params(key, in_channels, out_channels, eps=1e-5):
    k1, k2, k3, k4 = jax.random.split(key, 4)
    w1_hwio = 0.1 * jax.random.normal(
        k1, (3, 3, in_channels, out_channels), jnp.float32)
    b1 = 0.1 * jax.random.normal(k2, (out_channels,), jnp.float32)
    w2_hwio = 0.1 * jax.random.normal(
        k3, (3, 3, out_channels, out_channels), jnp.float32)
    b2 = 0.1 * jax.random.normal(k4, (out_channels,), jnp.float32)

    # BatchNorm defaults (eval): gamma=1, beta=0, running_mean=0, running_var=1
    gamma = jnp.ones((out_channels,), jnp.float32)
    beta = jnp.zeros((out_channels,), jnp.float32)
    mean = jnp.zeros((out_channels,), jnp.float32)
    var = jnp.ones((out_channels,), jnp.float32)
    bn_scale = gamma / jnp.sqrt(var + eps)
    bn_shift = beta - mean * bn_scale

    def pack(w_hwio, scale):
        cin_, cout_ = w_hwio.shape[2], w_hwio.shape[3]
        # (3,3,Cin,Cout) -> (Cout, 9*Cin); tap-major (dy, dx), then channel.
        # BN scale folded into the weights (exactly: scale * (W @ x)).
        w = w_hwio.reshape(9 * cin_, cout_) * scale[None, :]
        return jnp.transpose(w).astype(jnp.bfloat16)

    return {
        "w1m": pack(w1_hwio, bn_scale),                    # (Cmid, 9*Cin)  bf16
        "w2m": pack(w2_hwio, bn_scale),                    # (Cout, 9*Cmid) bf16
        "shift1": (bn_shift + b1 * bn_scale).reshape(out_channels, 1),
        "shift2": (bn_shift + b2 * bn_scale).reshape(out_channels, 1),
        # raw f32 copies + BN affine, used only by the pure-JAX reference check
        "w1_hwio": w1_hwio,
        "w2_hwio": w2_hwio,
        "scale1": bn_scale.reshape(out_channels, 1),
        "scale2": bn_scale.reshape(out_channels, 1),
        "rshift1": (bn_shift + b1 * bn_scale).reshape(out_channels, 1),
        "rshift2": (bn_shift + b2 * bn_scale).reshape(out_channels, 1),
    }


# ----------------------------------------------------------------------------
# Fused Up-block forward: one pallas_call, grid over batch.
# ----------------------------------------------------------------------------
def up_forward(params, x1_nchw, x2_nchw):
    n, c1, h1, w1 = x1_nchw.shape
    n2, c2, h, w = x2_nchw.shape
    assert n == n2
    hw, h1w1 = h * w, h1 * w1
    cin = c1 + c2
    cmid = params["w1m"].shape[0]
    cout = params["w2m"].shape[0]
    assert params["w1m"].shape[1] == 9 * cin
    assert params["w2m"].shape[1] == 9 * cmid

    up_mat = upsample_pad_operator(h1, w1, h, w)        # (H1*W1, H*W) f32

    # Free (metadata-only) host reshapes: NCHW -> (N, C, H*W).
    x1_flat = x1_nchw.reshape(n, c1, h1w1)
    x2_flat = x2_nchw.reshape(n, c2, hw)

    def kernel(x1_ref, x2_ref, up_ref, w1_ref, b1_ref, w2_ref, b2_ref, o_ref):
        # Column index of every flattened spatial position (for border masks).
        px = lax.broadcasted_iota(jnp.int32, (1, hw), 1) % w
        has_left = px >= 1          # position may read its x-1 neighbour
        has_right = px < (w - 1)    # position may read its x+1 neighbour

        def tap(xsrc, ry, rx):
            # xsrc: (C, H*W) f32 -> value of x[:, y+ry, x+rx] with zero pad.
            s = ry * w + rx
            c = xsrc.shape[0]
            if s > 0:
                t = jnp.concatenate(
                    [xsrc[:, s:], jnp.zeros((c, s), xsrc.dtype)], axis=1)
            elif s < 0:
                t = jnp.concatenate(
                    [jnp.zeros((c, -s), xsrc.dtype), xsrc[:, :s]], axis=1)
            else:
                t = xsrc
            if rx == 1:
                t = jnp.where(has_right, t, 0.0)
            elif rx == -1:
                t = jnp.where(has_left, t, 0.0)
            return t

        def im2col_bf16(xsrc):
            # (C, H*W) f32 -> (9*C, H*W) bf16; tap-major (dy, dx), then chan.
            # Taps/concat stay in f32 (aligned 8-sublane tiles), single cast.
            cols = [tap(xsrc, dy, dx) for dy in (-1, 0, 1) for dx in (-1, 0, 1)]
            return jnp.concatenate(cols, axis=0).astype(jnp.bfloat16)

        # 1) bilinear upsample (align_corners=True) + zero pad: one matmul.
        x1_up = jnp.dot(x1_ref[...], up_ref[...],
                        preferred_element_type=jnp.float32)        # (C1, H*W)
        # 2) channel concat [x2, upsampled x1].
        xcat = jnp.concatenate([x2_ref[...], x1_up], axis=0)       # (Cin, H*W)
        # 3) conv1 3x3 (pad 1), BN scale folded into weights, + shift + ReLU.
        y1 = jnp.dot(w1_ref[...], im2col_bf16(xcat),
                     preferred_element_type=jnp.float32)           # (Cmid,H*W)
        y1 = jnp.maximum(y1 + b1_ref[...], 0.0)
        # Dropout(p=0.5): identity in eval mode.
        # 4) conv2 3x3 (pad 1) + folded BN + ReLU.
        y2 = jnp.dot(w2_ref[...], im2col_bf16(y1),
                     preferred_element_type=jnp.float32)           # (Cout,H*W)
        # Dropout(p=0.5): identity in eval mode.
        o_ref[...] = jnp.maximum(y2 + b2_ref[...], 0.0)            # lane-dense

    out_flat = pl.pallas_call(
        kernel,
        out_shape=jax.ShapeDtypeStruct((n, cout, hw), jnp.float32),
        grid=(n,),
        in_specs=[
            pl.BlockSpec((None, c1, h1w1), lambda i: (i, 0, 0)),
            pl.BlockSpec((None, c2, hw), lambda i: (i, 0, 0)),
            pl.BlockSpec((h1w1, hw), lambda i: (0, 0)),
            pl.BlockSpec((cmid, 9 * cin), lambda i: (0, 0)),
            pl.BlockSpec((cmid, 1), lambda i: (0, 0)),
            pl.BlockSpec((cout, 9 * cmid), lambda i: (0, 0)),
            pl.BlockSpec((cout, 1), lambda i: (0, 0)),
        ],
        out_specs=pl.BlockSpec((None, cout, hw), lambda i: (i, 0, 0)),
        compiler_params=pltpu.CompilerParams(
            dimension_semantics=("parallel",)),
    )(x1_flat, x2_flat, up_mat,
      params["w1m"], params["shift1"],
      params["w2m"], params["shift2"])

    return out_flat.reshape(n, cout, h, w)


# ----------------------------------------------------------------------------
# Pure-JAX f32 reference (sanity check only).
# ----------------------------------------------------------------------------
def _bilinear_up_x2_ref(x_nchw):
    _, _, h, w = x_nchw.shape
    ho, wo = 2 * h, 2 * w

    def coords(out_sz, in_sz):
        if in_sz == 1:
            z = jnp.zeros((out_sz,), jnp.int32)
            return z, z, jnp.zeros((out_sz,), jnp.float32)
        pos = jnp.arange(out_sz, dtype=jnp.float32) * (in_sz - 1) / (out_sz - 1)
        lo = jnp.floor(pos).astype(jnp.int32)
        hi = jnp.minimum(lo + 1, in_sz - 1)
        return lo, hi, pos - lo.astype(jnp.float32)

    ylo, yhi, yf = coords(ho, h)
    xlo, xhi, xf = coords(wo, w)
    rows = (x_nchw[:, :, ylo, :] * (1.0 - yf)[None, None, :, None]
            + x_nchw[:, :, yhi, :] * yf[None, None, :, None])
    return (rows[:, :, :, xlo] * (1.0 - xf)[None, None, None, :]
            + rows[:, :, :, xhi] * xf[None, None, None, :])


def up_forward_reference(params, x1, x2):
    x1u = _bilinear_up_x2_ref(x1)
    dy = x2.shape[2] - x1u.shape[2]
    dx = x2.shape[3] - x1u.shape[3]
    x1u = jnp.pad(x1u, ((0, 0), (0, 0),
                        (dy // 2, dy - dy // 2), (dx // 2, dx - dx // 2)))
    x = jnp.concatenate([x2, x1u], axis=1)

    def conv_bn_relu(x, w_hwio, scale, shift):
        y = jax.lax.conv_general_dilated(
            x, w_hwio, window_strides=(1, 1), padding="SAME",
            dimension_numbers=("NCHW", "HWIO", "NCHW"))
        y = y * scale.reshape(1, -1, 1, 1) + shift.reshape(1, -1, 1, 1)
        return jnp.maximum(y, 0.0)

    x = conv_bn_relu(x, params["w1_hwio"], params["scale1"], params["rshift1"])
    x = conv_bn_relu(x, params["w2_hwio"], params["scale2"], params["rshift2"])
    return x


if __name__ == "__main__":
    key = jax.random.PRNGKey(0)
    k_params, k_x1, k_x2 = jax.random.split(key, 3)

    in_channels, out_channels = 8, 4
    # x1: coarse feature map (N, in_channels//2, H, W)
    # x2: skip connection    (N, in_channels//2, 2H, 2W)
    x1 = jax.random.normal(k_x1, (2, in_channels // 2, 8, 8), jnp.float32)
    x2 = jax.random.normal(k_x2, (2, in_channels // 2, 16, 16), jnp.float32)

    params = init_up_params(k_params, in_channels, out_channels)

    out = jax.block_until_ready(up_forward(params, x1, x2))
    assert out.shape == (2, out_channels, 16, 16), out.shape
    assert bool(jnp.all(jnp.isfinite(out)))

    # Loose sanity check vs an f32 reference (kernel conv matmuls are bf16).
    ref = jax.block_until_ready(up_forward_reference(params, x1, x2))
    max_diff = float(jnp.max(jnp.abs(out - ref)))
    assert max_diff < 0.3, f"kernel deviates from reference: {max_diff}"

    print("KERNEL_OK")
</pallas_src>

<mosaic_0001>
module attributes {stable_mosaic.version = 11 : i64} {
  func.func @kernel(%arg0: i32, %arg1: memref<1x4x64xf32, #tpu.memory_space<vmem>>, %arg2: memref<1x4x256xf32, #tpu.memory_space<vmem>>, %arg3: memref<64x256xf32, #tpu.memory_space<vmem>>, %arg4: memref<4x72xbf16, #tpu.memory_space<vmem>>, %arg5: memref<4x1xf32, #tpu.memory_space<vmem>>, %arg6: memref<4x36xbf16, #tpu.memory_space<vmem>>, %arg7: memref<4x1xf32, #tpu.memory_space<vmem>>, %arg8: memref<1x4x256xf32, #tpu.memory_space<vmem>>) attributes {dimension_semantics = [#tpu.dimension_semantics<parallel>], iteration_bounds = array<i64: 2>, scalar_prefetch = 0 : i64, scratch_operands = 0 : i64, tpu.core_type = #tpu.core_type<tc>, window_params = [{transform_indices = @transform_0, window_bounds = array<i64: 1, 4, 64>}, {transform_indices = @transform_1, window_bounds = array<i64: 1, 4, 256>}, {pipeline_mode = #tpu.pipeline_mode<synchronous>, transform_indices = @transform_2, window_bounds = array<i64: 64, 256>}, {pipeline_mode = #tpu.pipeline_mode<synchronous>, transform_indices = @transform_3, window_bounds = array<i64: 4, 72>}, {pipeline_mode = #tpu.pipeline_mode<synchronous>, transform_indices = @transform_4, window_bounds = array<i64: 4, 1>}, {pipeline_mode = #tpu.pipeline_mode<synchronous>, transform_indices = @transform_5, window_bounds = array<i64: 4, 36>}, {pipeline_mode = #tpu.pipeline_mode<synchronous>, transform_indices = @transform_6, window_bounds = array<i64: 4, 1>}, {transform_indices = @transform_7, window_bounds = array<i64: 1, 4, 256>}]} {
    %0 = tpu.iota {dimensions = array<i32: 1>} : vector<1x256xi32>
    %c16_i32 = arith.constant 16 : i32
    %c0_i32 = arith.constant 0 : i32
    %1 = arith.cmpi eq, %c16_i32, %c0_i32 : i32
    %c1_i32 = arith.constant 1 : i32
    %2 = arith.select %1, %c1_i32, %c16_i32 : i32
    %3 = vector.broadcast %2 : i32 to vector<1x256xi32>
    %4 = arith.remsi %0, %3 : vector<1x256xi32>
    %c0_i32_0 = arith.constant 0 : i32
    %5 = vector.broadcast %c0_i32_0 : i32 to vector<1x256xi32>
    %6 = arith.cmpi ne, %4, %5 : vector<1x256xi32>
    %c0_i32_1 = arith.constant 0 : i32
    %7 = vector.broadcast %c0_i32_1 : i32 to vector<1x256xi32>
    %8 = arith.cmpi slt, %4, %7 : vector<1x256xi32>
    %c0_i32_2 = arith.constant 0 : i32
    %9 = arith.cmpi slt, %2, %c0_i32_2 : i32
    %10 = vector.broadcast %9 : i1 to vector<1x256xi1>
    %11 = vector.broadcast %10 : vector<1x256xi1> to vector<1x256xi1>
    %12 = arith.xori %8, %11 : vector<1x256xi1>
    %13 = arith.andi %12, %6 : vector<1x256xi1>
    %14 = vector.broadcast %2 : i32 to vector<1x256xi32>
    %15 = arith.addi %4, %14 : vector<1x256xi32>
    %16 = arith.select %13, %15, %4 : vector<1x256xi1>, vector<1x256xi32>
    %c1_i32_3 = arith.constant 1 : i32
    %17 = vector.broadcast %c1_i32_3 : i32 to vector<1x256xi32>
    %18 = arith.cmpi sge, %16, %17 : vector<1x256xi32>
    %c15_i32 = arith.constant 15 : i32
    %19 = vector.broadcast %c15_i32 : i32 to vector<1x256xi32>
    %20 = arith.cmpi slt, %16, %19 : vector<1x256xi32>
    %c0 = arith.constant 0 : index
    %c0_4 = arith.constant 0 : index
    %c0_5 = arith.constant 0 : index
    %21 = vector.load %arg1[%c0, %c0_4, %c0_5] : memref<1x4x64xf32, #tpu.memory_space<vmem>>, vector<1x4x64xf32>
    %22 = vector.shape_cast %21 : vector<1x4x64xf32> to vector<4x64xf32>
    %c0_6 = arith.constant 0 : index
    %c0_7 = arith.constant 0 : index
    %23 = vector.load %arg3[%c0_6, %c0_7] : memref<64x256xf32, #tpu.memory_space<vmem>>, vector<64x256xf32>
    %cst = arith.constant dense<0.000000e+00> : vector<4x256xf32>
    %24 = tpu.matmul %22, %23, %cst {dimension_numbers = #tpu.dot_dimension_numbers<[1], [0], [0], [1], [0, 0, 1, 1], [], []>} : vector<4x64xf32>, vector<64x256xf32>, vector<4x256xf32> -> vector<4x256xf32>
    %c0_8 = arith.constant 0 : index
    %c0_9 = arith.constant 0 : index
    %c0_10 = arith.constant 0 : index
    %25 = vector.load %arg2[%c0_8, %c0_9, %c0_10] : memref<1x4x256xf32, #tpu.memory_space<vmem>>, vector<1x4x256xf32>
    %26 = vector.shape_cast %25 : vector<1x4x256xf32> to vector<4x256xf32>
    %27 = tpu.concatenate %26, %24 in 0 : vector<4x256xf32>, vector<4x256xf32> -> vector<8x256xf32>
    %c0_11 = arith.constant 0 : index
    %c0_12 = arith.constant 0 : index
    %28 = vector.load %arg4[%c0_11, %c0_12] : memref<4x72xbf16, #tpu.memory_space<vmem>>, vector<4x72xbf16>
    %cst_13 = arith.constant 0.000000e+00 : f32
    %29 = vector.broadcast %cst_13 : f32 to vector<8x17xf32>
    %30 = vector.extract_strided_slice %27 {offsets = [0, 0], sizes = [8, 239], strides = [1, 1]} : vector<8x256xf32> to vector<8x239xf32>
    %31 = tpu.concatenate %29, %30 in 1 : vector<8x17xf32>, vector<8x239xf32> -> vector<8x256xf32>
    %cst_14 = arith.constant 0.000000e+00 : f32
    %32 = vector.shape_cast %18 : vector<1x256xi1> to vector<1x256xi1>
    %33 = vector.broadcast %32 : vector<1x256xi1> to vector<8x256xi1>
    %34 = vector.broadcast %cst_14 : f32 to vector<8x256xf32>
    %35 = arith.select %33, %31, %34 : vector<8x256xi1>, vector<8x256xf32>
    %cst_15 = arith.constant 0.000000e+00 : f32
    %36 = vector.broadcast %cst_15 : f32 to vector<8x16xf32>
    %37 = vector.extract_strided_slice %27 {offsets = [0, 0], sizes = [8, 240], strides = [1, 1]} : vector<8x256xf32> to vector<8x240xf32>
    %38 = tpu.concatenate %36, %37 in 1 : vector<8x16xf32>, vector<8x240xf32> -> vector<8x256xf32>
    %cst_16 = arith.constant 0.000000e+00 : f32
    %39 = vector.broadcast %cst_16 : f32 to vector<8x15xf32>
    %40 = vector.extract_strided_slice %27 {offsets = [0, 0], sizes = [8, 241], strides = [1, 1]} : vector<8x256xf32> to vector<8x241xf32>
    %41 = tpu.concatenate %39, %40 in 1 : vector<8x15xf32>, vector<8x241xf32> -> vector<8x256xf32>
    %cst_17 = arith.constant 0.000000e+00 : f32
    %42 = vector.shape_cast %20 : vector<1x256xi1> to vector<1x256xi1>
    %43 = vector.broadcast %42 : vector<1x256xi1> to vector<8x256xi1>
    %44 = vector.broadcast %cst_17 : f32 to vector<8x256xf32>
    %45 = arith.select %43, %41, %44 : vector<8x256xi1>, vector<8x256xf32>
    %cst_18 = arith.constant 0.000000e+00 : f32
    %46 = vector.broadcast %cst_18 : f32 to vector<8x1xf32>
    %47 = vector.extract_strided_slice %27 {offsets = [0, 0], sizes = [8, 255], strides = [1, 1]} : vector<8x256xf32> to vector<8x255xf32>
    %48 = tpu.concatenate %46, %47 in 1 : vector<8x1xf32>, vector<8x255xf32> -> vector<8x256xf32>
    %cst_19 = arith.constant 0.000000e+00 : f32
    %49 = vector.shape_cast %18 : vector<1x256xi1> to vector<1x256xi1>
    %50 = vector.broadcast %49 : vector<1x256xi1> to vector<8x256xi1>
    %51 = vector.broadcast %cst_19 : f32 to vector<8x256xf32>
    %52 = arith.select %50, %48, %51 : vector<8x256xi1>, vector<8x256xf32>
    %53 = vector.extract_strided_slice %27 {offsets = [0, 1], sizes = [8, 255], strides = [1, 1]} : vector<8x256xf32> to vector<8x255xf32>
    %cst_20 = arith.constant 0.000000e+00 : f32
    %54 = vector.broadcast %cst_20 : f32 to vector<8x1xf32>
    %55 = tpu.concatenate %53, %54 in 1 : vector<8x255xf32>, vector<8x1xf32> -> vector<8x256xf32>
    %cst_21 = arith.constant 0.000000e+00 : f32
    %56 = vector.shape_cast %20 : vector<1x256xi1> to vector<1x256xi1>
    %57 = vector.broadcast %56 : vector<1x256xi1> to vector<8x256xi1>
    %58 = vector.broadcast %cst_21 : f32 to vector<8x256xf32>
    %59 = arith.select %57, %55, %58 : vector<8x256xi1>, vector<8x256xf32>
    %60 = vector.extract_strided_slice %27 {offsets = [0, 15], sizes = [8, 241], strides = [1, 1]} : vector<8x256xf32> to vector<8x241xf32>
    %cst_22 = arith.constant 0.000000e+00 : f32
    %61 = vector.broadcast %cst_22 : f32 to vector<8x15xf32>
    %62 = tpu.concatenate %60, %61 in 1 : vector<8x241xf32>, vector<8x15xf32> -> vector<8x256xf32>
    %cst_23 = arith.constant 0.000000e+00 : f32
    %63 = vector.shape_cast %18 : vector<1x256xi1> to vector<1x256xi1>
    %64 = vector.broadcast %63 : vector<1x256xi1> to vector<8x256xi1>
    %65 = vector.broadcast %cst_23 : f32 to vector<8x256xf32>
    %66 = arith.select %64, %62, %65 : vector<8x256xi1>, vector<8x256xf32>
    %67 = vector.extract_strided_slice %27 {offsets = [0, 16], sizes = [8, 240], strides = [1, 1]} : vector<8x256xf32> to vector<8x240xf32>
    %cst_24 = arith.constant 0.000000e+00 : f32
    %68 = vector.broadcast %cst_24 : f32 to vector<8x16xf32>
    %69 = tpu.concatenate %67, %68 in 1 : vector<8x240xf32>, vector<8x16xf32> -> vector<8x256xf32>
    %70 = vector.extract_strided_slice %27 {offsets = [0, 17], sizes = [8, 239], strides = [1, 1]} : vector<8x256xf32> to vector<8x239xf32>
    %cst_25 = arith.constant 0.000000e+00 : f32
    %71 = vector.broadcast %cst_25 : f32 to vector<8x17xf32>
    %72 = tpu.concatenate %70, %71 in 1 : vector<8x239xf32>, vector<8x17xf32> -> vector<8x256xf32>
    %cst_26 = arith.constant 0.000000e+00 : f32
    %73 = vector.shape_cast %20 : vector<1x256xi1> to vector<1x256xi1>
    %74 = vector.broadcast %73 : vector<1x256xi1> to vector<8x256xi1>
    %75 = vector.broadcast %cst_26 : f32 to vector<8x256xf32>
    %76 = arith.select %74, %72, %75 : vector<8x256xi1>, vector<8x256xf32>
    %77 = tpu.concatenate %35, %38, %45, %52, %27, %59, %66, %69, %76 in 0 : vector<8x256xf32>, vector<8x256xf32>, vector<8x256xf32>, vector<8x256xf32>, vector<8x256xf32>, vector<8x256xf32>, vector<8x256xf32>, vector<8x256xf32>, vector<8x256xf32> -> vector<72x256xf32>
    %78 = arith.truncf %77 : vector<72x256xf32> to vector<72x256xbf16>
    %cst_27 = arith.constant dense<0.000000e+00> : vector<4x256xf32>
    %79 = tpu.matmul %28, %78, %cst_27 {dimension_numbers = #tpu.dot_dimension_numbers<[1], [0], [0], [1], [0, 0, 1, 1], [], []>} : vector<4x72xbf16>, vector<72x256xbf16>, vector<4x256xf32> -> vector<4x256xf32>
    %c0_28 = arith.constant 0 : index
    %c0_29 = arith.constant 0 : index
    %80 = vector.load %arg5[%c0_28, %c0_29] : memref<4x1xf32, #tpu.memory_space<vmem>>, vector<4x1xf32>
    %81 = vector.broadcast %80 : vector<4x1xf32> to vector<4x256xf32>
    %82 = arith.addf %79, %81 : vector<4x256xf32>
    %cst_30 = arith.constant 0.000000e+00 : f32
    %83 = vector.broadcast %cst_30 : f32 to vector<4x256xf32>
    %84 = arith.maximumf %82, %83 : vector<4x256xf32>
    %c0_31 = arith.constant 0 : index
    %c0_32 = arith.constant 0 : index
    %85 = vector.load %arg6[%c0_31, %c0_32] : memref<4x36xbf16, #tpu.memory_space<vmem>>, vector<4x36xbf16>
    %cst_33 = arith.constant 0.000000e+00 : f32
    %86 = vector.broadcast %cst_33 : f32 to vector<4x17xf32>
    %87 = vector.extract_strided_slice %84 {offsets = [0, 0], sizes = [4, 239], strides = [1, 1]} : vector<4x256xf32> to vector<4x239xf32>
    %88 = tpu.concatenate %86, %87 in 1 : vector<4x17xf32>, vector<4x239xf32> -> vector<4x256xf32>
    %cst_34 = arith.constant 0.000000e+00 : f32
    %89 = vector.shape_cast %18 : vector<1x256xi1> to vector<1x256xi1>
    %90 = vector.broadcast %89 : vector<1x256xi1> to vector<4x256xi1>
    %91 = vector.broadcast %cst_34 : f32 to vector<4x256xf32>
    %92 = arith.select %90, %88, %91 : vector<4x256xi1>, vector<4x256xf32>
    %cst_35 = arith.constant 0.000000e+00 : f32
    %93 = vector.broadcast %cst_35 : f32 to vector<4x16xf32>
    %94 = vector.extract_strided_slice %84 {offsets = [0, 0], sizes = [4, 240], strides = [1, 1]} : vector<4x256xf32> to vector<4x240xf32>
    %95 = tpu.concatenate %93, %94 in 1 : vector<4x16xf32>, vector<4x240xf32> -> vector<4x256xf32>
    %cst_36 = arith.constant 0.000000e+00 : f32
    %96 = vector.broadcast %cst_36 : f32 to vector<4x15xf32>
    %97 = vector.extract_strided_slice %84 {offsets = [0, 0], sizes = [4, 241], strides = [1, 1]} : vector<4x256xf32> to vector<4x241xf32>
    %98 = tpu.concatenate %96, %97 in 1 : vector<4x15xf32>, vector<4x241xf32> -> vector<4x256xf32>
    %cst_37 = arith.constant 0.000000e+00 : f32
    %99 = vector.shape_cast %20 : vector<1x256xi1> to vector<1x256xi1>
    %100 = vector.broadcast %99 : vector<1x256xi1> to vector<4x256xi1>
    %101 = vector.broadcast %cst_37 : f32 to vector<4x256xf32>
    %102 = arith.select %100, %98, %101 : vector<4x256xi1>, vector<4x256xf32>
    %cst_38 = arith.constant 0.000000e+00 : f32
    %103 = vector.broadcast %cst_38 : f32 to vector<4x1xf32>
    %104 = vector.extract_strided_slice %84 {offsets = [0, 0], sizes = [4, 255], strides = [1, 1]} : vector<4x256xf32> to vector<4x255xf32>
    %105 = tpu.concatenate %103, %104 in 1 : vector<4x1xf32>, vector<4x255xf32> -> vector<4x256xf32>
    %cst_39 = arith.constant 0.000000e+00 : f32
    %106 = vector.shape_cast %18 : vector<1x256xi1> to vector<1x256xi1>
    %107 = vector.broadcast %106 : vector<1x256xi1> to vector<4x256xi1>
    %108 = vector.broadcast %cst_39 : f32 to vector<4x256xf32>
    %109 = arith.select %107, %105, %108 : vector<4x256xi1>, vector<4x256xf32>
    %110 = vector.extract_strided_slice %84 {offsets = [0, 1], sizes = [4, 255], strides = [1, 1]} : vector<4x256xf32> to vector<4x255xf32>
    %cst_40 = arith.constant 0.000000e+00 : f32
    %111 = vector.broadcast %cst_40 : f32 to vector<4x1xf32>
    %112 = tpu.concatenate %110, %111 in 1 : vector<4x255xf32>, vector<4x1xf32> -> vector<4x256xf32>
    %cst_41 = arith.constant 0.000000e+00 : f32
    %113 = vector.shape_cast %20 : vector<1x256xi1> to vector<1x256xi1>
    %114 = vector.broadcast %113 : vector<1x256xi1> to vector<4x256xi1>
    %115 = vector.broadcast %cst_41 : f32 to vector<4x256xf32>
    %116 = arith.select %114, %112, %115 : vector<4x256xi1>, vector<4x256xf32>
    %117 = vector.extract_strided_slice %84 {offsets = [0, 15], sizes = [4, 241], strides = [1, 1]} : vector<4x256xf32> to vector<4x241xf32>
    %cst_42 = arith.constant 0.000000e+00 : f32
    %118 = vector.broadcast %cst_42 : f32 to vector<4x15xf32>
    %119 = tpu.concatenate %117, %118 in 1 : vector<4x241xf32>, vector<4x15xf32> -> vector<4x256xf32>
    %cst_43 = arith.constant 0.000000e+00 : f32
    %120 = vector.shape_cast %18 : vector<1x256xi1> to vector<1x256xi1>
    %121 = vector.broadcast %120 : vector<1x256xi1> to vector<4x256xi1>
    %122 = vector.broadcast %cst_43 : f32 to vector<4x256xf32>
    %123 = arith.select %121, %119, %122 : vector<4x256xi1>, vector<4x256xf32>
    %124 = vector.extract_strided_slice %84 {offsets = [0, 16], sizes = [4, 240], strides = [1, 1]} : vector<4x256xf32> to vector<4x240xf32>
    %cst_44 = arith.constant 0.000000e+00 : f32
    %125 = vector.broadcast %cst_44 : f32 to vector<4x16xf32>
    %126 = tpu.concatenate %124, %125 in 1 : vector<4x240xf32>, vector<4x16xf32> -> vector<4x256xf32>
    %127 = vector.extract_strided_slice %84 {offsets = [0, 17], sizes = [4, 239], strides = [1, 1]} : vector<4x256xf32> to vector<4x239xf32>
    %cst_45 = arith.constant 0.000000e+00 : f32
    %128 = vector.broadcast %cst_45 : f32 to vector<4x17xf32>
    %129 = tpu.concatenate %127, %128 in 1 : vector<4x239xf32>, vector<4x17xf32> -> vector<4x256xf32>
    %cst_46 = arith.constant 0.000000e+00 : f32
    %130 = vector.shape_cast %20 : vector<1x256xi1> to vector<1x256xi1>
    %131 = vector.broadcast %130 : vector<1x256xi1> to vector<4x256xi1>
    %132 = vector.broadcast %cst_46 : f32 to vector<4x256xf32>
    %133 = arith.select %131, %129, %132 : vector<4x256xi1>, vector<4x256xf32>
    %134 = tpu.concatenate %92, %95, %102, %109, %84, %116, %123, %126, %133 in 0 : vector<4x256xf32>, vector<4x256xf32>, vector<4x256xf32>, vector<4x256xf32>, vector<4x256xf32>, vector<4x256xf32>, vector<4x256xf32>, vector<4x256xf32>, vector<4x256xf32> -> vector<36x256xf32>
    %135 = arith.truncf %134 : vector<36x256xf32> to vector<36x256xbf16>
    %cst_47 = arith.constant dense<0.000000e+00> : vector<4x256xf32>
    %136 = tpu.matmul %85, %135, %cst_47 {dimension_numbers = #tpu.dot_dimension_numbers<[1], [0], [0], [1], [0, 0, 1, 1], [], []>} : vector<4x36xbf16>, vector<36x256xbf16>, vector<4x256xf32> -> vector<4x256xf32>
    %c0_48 = arith.constant 0 : index
    %c0_49 = arith.constant 0 : index
    %137 = vector.load %arg7[%c0_48, %c0_49] : memref<4x1xf32, #tpu.memory_space<vmem>>, vector<4x1xf32>
    %138 = vector.broadcast %137 : vector<4x1xf32> to vector<4x256xf32>
    %139 = arith.addf %136, %138 : vector<4x256xf32>
    %cst_50 = arith.constant 0.000000e+00 : f32
    %140 = vector.broadcast %cst_50 : f32 to vector<4x256xf32>
    %141 = arith.maximumf %139, %140 : vector<4x256xf32>
    %c0_51 = arith.constant 0 : index
    %c0_52 = arith.constant 0 : index
    %c0_53 = arith.constant 0 : index
    %142 = vector.load %arg8[%c0_51, %c0_52, %c0_53] : memref<1x4x256xf32, #tpu.memory_space<vmem>>, vector<1x4x256xf32>
    %143 = vector.shape_cast %142 : vector<1x4x256xf32> to vector<4x256xf32>
    %144 = vector.shape_cast %141 : vector<4x256xf32> to vector<1x4x256xf32>
    tpu.vector_store %arg8[%c0_51, %c0_52, %c0_53], %144 {strides = array<i32>} : memref<1x4x256xf32, #tpu.memory_space<vmem>>, vector<1x4x256xf32>,
    return
  }
  func.func @transform_0(%arg0: i32) -> (i32, i32, i32) {
    %c0_i32 = arith.constant 0 : i32
    %c0_i32_0 = arith.constant 0 : i32
    %c0_i32_1 = arith.constant 0 : i32
    return %arg0, %c0_i32, %c0_i32_0 : i32, i32, i32
  }
  func.func @transform_1(%arg0: i32) -> (i32, i32, i32) {
    %c0_i32 = arith.constant 0 : i32
    %c0_i32_0 = arith.constant 0 : i32
    %c0_i32_1 = arith.constant 0 : i32
    return %arg0, %c0_i32, %c0_i32_0 : i32, i32, i32
  }
  func.func @transform_2(%arg0: i32) -> (i32, i32) {
    %c0_i32 = arith.constant 0 : i32
    %c0_i32_0 = arith.constant 0 : i32
    %c0_i32_1 = arith.constant 0 : i32
    return %c0_i32, %c0_i32_0 : i32, i32
  }
  func.func @transform_3(%arg0: i32) -> (i32, i32) {
    %c0_i32 = arith.constant 0 : i32
    %c0_i32_0 = arith.constant 0 : i32
    %c0_i32_1 = arith.constant 0 : i32
    return %c0_i32, %c0_i32_0 : i32, i32
  }
  func.func @transform_4(%arg0: i32) -> (i32, i32) {
    %c0_i32 = arith.constant 0 : i32
    %c0_i32_0 = arith.constant 0 : i32
    %c0_i32_1 = arith.constant 0 : i32
    return %c0_i32, %c0_i32_0 : i32, i32
  }
  func.func @transform_5(%arg0: i32) -> (i32, i32) {
    %c0_i32 = arith.constant 0 : i32
    %c0_i32_0 = arith.constant 0 : i32
    %c0_i32_1 = arith.constant 0 : i32
    return %c0_i32, %c0_i32_0 : i32, i32
  }
  func.func @transform_6(%arg0: i32) -> (i32, i32) {
    %c0_i32 = arith.constant 0 : i32
    %c0_i32_0 = arith.constant 0 : i32
    %c0_i32_1 = arith.constant 0 : i32
    return %c0_i32, %c0_i32_0 : i32, i32
  }
  func.func @transform_7(%arg0: i32) -> (i32, i32, i32) {
    %c0_i32 = arith.constant 0 : i32
    %c0_i32_0 = arith.constant 0 : i32
    %c0_i32_1 = arith.constant 0 : i32
    return %arg0, %c0_i32, %c0_i32_0 : i32, i32, i32
  }
}

</mosaic_0001>

<llo_original>
// kernel: tpu_custom_call.1
$region0: #{tpu_custom_call.1}
  #allocation0 [shape = 'u32[]', space=smem, size = 0x4, offset = 0x4, fixed_abs, tag = 'smem constant byte address 0x4 - core index']
  #allocation1 [shape = 'u32[144,128]{1,0:T(1,128)}', space=vmem, size = 0x12000, scoped, tag = 'internal scratch']
  %s0 = inlined_call_operand.vmem [shape: f32[2,4,64], index: 0, kind: input, shape index: {}]
  %s1 = inlined_call_operand.hbm [shape: f32[2,4,256], index: 1, kind: input, shape index: {}]
  %s2 = inlined_call_operand.hbm [shape: f32[64,256], index: 2, kind: input, shape index: {}]
  %s3 = inlined_call_operand.vmem [shape: bf16[4,72], index: 3, kind: input, shape index: {}]
  %s4 = inlined_call_operand.vmem [shape: f32[4,1], index: 4, kind: input, shape index: {}]
  %s5 = inlined_call_operand.vmem [shape: bf16[4,36], index: 5, kind: input, shape index: {}]
  %s6 = inlined_call_operand.vmem [shape: f32[4,1], index: 6, kind: input, shape index: {}]
  %s7 = inlined_call_operand.hbm [shape: f32[2,4,256], index: 7, kind: output, shape index: {}]
  %s8 = sld [smem:[#allocation0]]
  $region69: #{tpu_custom_call.1} parent=0
    _
  %s10 = ssub.s32 1, %s8
  %s11 = scalar_select 0, %s10, %s8
  $region1: #{tpu_custom_call.1} parent=0
    #allocation2 [shape = 'u8[8192]{0}', space=vmem, size = 0x2000, scoped, tag = 'input window, operand 1']
    #allocation3 [shape = 's32[2]{0}', space=sflag, size = 0x8, scoped, tag = 'scoped memory for tpu_custom_call.1']
    #allocation4 [shape = 's32[2]{0}', space=sflag, size = 0x8, scoped, tag = 'scoped memory for tpu_custom_call.1']
    #allocation5 [shape = 'u8[65536]{0}', space=vmem, size = 0x10000, scoped, tag = 'input window, operand 2, single buffered']
    #allocation6 [shape = 's32[1]{0}', space=sflag, size = 0x4, scoped, tag = 'scoped memory for tpu_custom_call.1']
    #allocation7 [shape = 'u8[8192]{0}', space=vmem, size = 0x2000, scoped, tag = 'output window, operand 0']
    %12 = vsyncpa [#allocation3], 0
    %s13 = scalar_lea.sflag [#allocation3], 1
    %14 = vsyncpa %s13, 0
    %15 = vsyncpa [#allocation6], 0
    %16 = vsyncpa [#allocation4], 0
    %s17 = scalar_lea.sflag [#allocation4], 1
    %18 = vsyncpa %s17, 0
    loop: start=0, step=1, limit=4
    $region2: #{tpu_custom_call.1} parent=1 // loop_pre_header
      _
    $region3: #{tpu_custom_call.1} parent=1 // loop_header
      %s20 = sphi 0, %s24
      %p21 = scmp.ge.s32.totalorder %s20, 4
      %s30 = sphi 0, %s32
      %s33 = sphi 0, %s30
      %s34 = sphi 0, %s33
      %s50 = sphi 0, %s34
      %s56 = sphi 0, %s58
      %s59 = sphi 0, %s56
      %s60 = sphi 0, %s59
      %s76 = sphi 0, %s60
      %s80 = sphi 0, %s80
      %s82 = sphi 0, %s80
      %s83 = sphi 0, %s82
      %s97 = sphi 0, %s83
      %s101 = sphi 0, %s101
      %s103 = sphi 0, %s101
      %s104 = sphi 0, %s103
      %s118 = sphi 0, %s104
      %s122 = sphi 0, %s122
      %s124 = sphi 0, %s122
      %s125 = sphi 0, %s124
      %s139 = sphi 0, %s125
      %s143 = sphi 0, %s143
      %s145 = sphi 0, %s143
      %s146 = sphi 0, %s145
      %s160 = sphi 0, %s146
      %s164 = sphi 0, %s164
      %s166 = sphi 0, %s164
      %s167 = sphi 0, %s166
      %s181 = sphi 0, %s167
      %s187 = sphi 0, %s189
      %s190 = sphi 0, %s187
      %s191 = sphi 0, %s190
      %s207 = sphi 0, %s191
    $region4: #{tpu_custom_call.1} parent=1 // loop_header_branch
      %23 = sbr.rel (%p21) target = $region8
    $region5: #{tpu_custom_call.1} parent=1 // loop_body
      %s25 = ssub.s32 %s20, 1
      %s26 = ssub.s32 %s20, 2
      %s27 = sadd.s32 %s20, 1
      %s28 = ssub.s32 %s20, %s27
      %p29 = scmp.eq.s32.totalorder %s28, 0
      %s31 = sadd.s32 %s30, 1
      %s32 = scalar_select %p29, %s30, %s31
      %p35 = pneg %p29
      %p36 = scmp.eq.s32.totalorder %s20, 1
      %p37 = por %p35, %p36
      %p38 = scmp.ne.s32.totalorder %s30, %s33
      %p39 = scmp.eq.s32.totalorder %s20, 0
      %p40 = por %p38, %p39
      %p41 = scmp.ne.s32.totalorder %s30, %s33
      %p42 = scmp.eq.s32.totalorder %s25, 1
      %p43 = por %p41, %p42
      %p44 = scmp.ne.s32.totalorder %s33, %s34
      %p45 = scmp.eq.s32.totalorder %s25, 0
      %p46 = por %p44, %p45
      %p47 = scmp.ne.s32.totalorder %s33, %s34
      %p48 = scmp.eq.s32.totalorder %s26, 1
      %p49 = por %p47, %p48
      %p51 = scmp.ne.s32.totalorder %s34, %s50
      %p52 = scmp.eq.s32.totalorder %s26, 0
      %p53 = por %p51, %p52
      %s54 = ssub.s32 %s20, %s27
      %p55 = scmp.eq.s32.totalorder %s54, 0
      %s57 = sadd.s32 %s56, 1
      %s58 = scalar_select %p55, %s56, %s57
      %p61 = pneg %p55
      %p62 = scmp.eq.s32.totalorder %s20, 1
      %p63 = por %p61, %p62
      %p64 = scmp.ne.s32.totalorder %s56, %s59
      %p65 = scmp.eq.s32.totalorder %s20, 0
      %p66 = por %p64, %p65
      %p67 = scmp.ne.s32.totalorder %s56, %s59
      %p68 = scmp.eq.s32.totalorder %s25, 1
      %p69 = por %p67, %p68
      %p70 = scmp.ne.s32.totalorder %s59, %s60
      %p71 = scmp.eq.s32.totalorder %s25, 0
      %p72 = por %p70, %p71
      %p73 = scmp.ne.s32.totalorder %s59, %s60
      %p74 = scmp.eq.s32.totalorder %s26, 1
      %p75 = por %p73, %p74
      %p77 = scmp.ne.s32.totalorder %s60, %s76
      %p78 = scmp.eq.s32.totalorder %s26, 0
      %p79 = por %p77, %p78
      %s81 = sadd.s32 %s80, 1
      %p84 = scmp.eq.s32.totalorder %s20, 1
      %p85 = scmp.ne.s32.totalorder %s80, %s82
      %p86 = scmp.eq.s32.totalorder %s20, 0
      %p87 = por %p85, %p86
      %p88 = scmp.ne.s32.totalorder %s80, %s82
      %p89 = scmp.eq.s32.totalorder %s25, 1
      %p90 = por %p88, %p89
      %p91 = scmp.ne.s32.totalorder %s82, %s83
      %p92 = scmp.eq.s32.totalorder %s25, 0
      %p93 = por %p91, %p92
      %p94 = scmp.ne.s32.totalorder %s82, %s83
      %p95 = scmp.eq.s32.totalorder %s26, 1
      %p96 = por %p94, %p95
      %p98 = scmp.ne.s32.totalorder %s83, %s97
      %p99 = scmp.eq.s32.totalorder %s26, 0
      %p100 = por %p98, %p99
      %s102 = sadd.s32 %s101, 1
      %p105 = scmp.eq.s32.totalorder %s20, 1
      %p106 = scmp.ne.s32.totalorder %s101, %s103
      %p107 = scmp.eq.s32.totalorder %s20, 0
      %p108 = por %p106, %p107
      %p109 = scmp.ne.s32.totalorder %s101, %s103
      %p110 = scmp.eq.s32.totalorder %s25, 1
      %p111 = por %p109, %p110
      %p112 = scmp.ne.s32.totalorder %s103, %s104
      %p113 = scmp.eq.s32.totalorder %s25, 0
      %p114 = por %p112, %p113
      %p115 = scmp.ne.s32.totalorder %s103, %s104
      %p116 = scmp.eq.s32.totalorder %s26, 1
      %p117 = por %p115, %p116
      %p119 = scmp.ne.s32.totalorder %s104, %s118
      %p120 = scmp.eq.s32.totalorder %s26, 0
      %p121 = por %p119, %p120
      %s123 = sadd.s32 %s122, 1
      %p126 = scmp.eq.s32.totalorder %s20, 1
      %p127 = scmp.ne.s32.totalorder %s122, %s124
      %p128 = scmp.eq.s32.totalorder %s20, 0
      %p129 = por %p127, %p128
      %p130 = scmp.ne.s32.totalorder %s122, %s124
      %p131 = scmp.eq.s32.totalorder %s25, 1
      %p132 = por %p130, %p131
      %p133 = scmp.ne.s32.totalorder %s124, %s125
      %p134 = scmp.eq.s32.totalorder %s25, 0
      %p135 = por %p133, %p134
      %p136 = scmp.ne.s32.totalorder %s124, %s125
      %p137 = scmp.eq.s32.totalorder %s26, 1
      %p138 = por %p136, %p137
      %p140 = scmp.ne.s32.totalorder %s125, %s139
      %p141 = scmp.eq.s32.totalorder %s26, 0
      %p142 = por %p140, %p141
      %s144 = sadd.s32 %s143, 1
      %p147 = scmp.eq.s32.totalorder %s20, 1
      %p148 = scmp.ne.s32.totalorder %s143, %s145
      %p149 = scmp.eq.s32.totalorder %s20, 0
      %p150 = por %p148, %p149
      %p151 = scmp.ne.s32.totalorder %s143, %s145
      %p152 = scmp.eq.s32.totalorder %s25, 1
      %p153 = por %p151, %p152
      %p154 = scmp.ne.s32.totalorder %s145, %s146
      %p155 = scmp.eq.s32.totalorder %s25, 0
      %p156 = por %p154, %p155
      %p157 = scmp.ne.s32.totalorder %s145, %s146
      %p158 = scmp.eq.s32.totalorder %s26, 1
      %p159 = por %p157, %p158
      %p161 = scmp.ne.s32.totalorder %s146, %s160
      %p162 = scmp.eq.s32.totalorder %s26, 0
      %p163 = por %p161, %p162
      %s165 = sadd.s32 %s164, 1
      %p168 = scmp.eq.s32.totalorder %s20, 1
      %p169 = scmp.ne.s32.totalorder %s164, %s166
      %p170 = scmp.eq.s32.totalorder %s20, 0
      %p171 = por %p169, %p170
      %p172 = scmp.ne.s32.totalorder %s164, %s166
      %p173 = scmp.eq.s32.totalorder %s25, 1
      %p174 = por %p172, %p173
      %p175 = scmp.ne.s32.totalorder %s166, %s167
      %p176 = scmp.eq.s32.totalorder %s25, 0
      %p177 = por %p175, %p176
      %p178 = scmp.ne.s32.totalorder %s166, %s167
      %p179 = scmp.eq.s32.totalorder %s26, 1
      %p180 = por %p178, %p179
      %p182 = scmp.ne.s32.totalorder %s167, %s181
      %p183 = scmp.eq.s32.totalorder %s26, 0
      %p184 = por %p182, %p183
      %s185 = ssub.s32 %s20, %s27
      %p186 = scmp.eq.s32.totalorder %s185, 0
      %s188 = sadd.s32 %s187, 1
      %s189 = scalar_select %p186, %s187, %s188
      %p192 = pneg %p186
      %p193 = scmp.eq.s32.totalorder %s20, 1
      %p194 = por %p192, %p193
      %p195 = scmp.ne.s32.totalorder %s187, %s190
      %p196 = scmp.eq.s32.totalorder %s20, 0
      %p197 = por %p195, %p196
      %p198 = scmp.ne.s32.totalorder %s187, %s190
      %p199 = scmp.eq.s32.totalorder %s25, 1
      %p200 = por %p198, %p199
      %p201 = scmp.ne.s32.totalorder %s190, %s191
      %p202 = scmp.eq.s32.totalorder %s25, 0
      %p203 = por %p201, %p202
      %p204 = scmp.ne.s32.totalorder %s190, %s191
      %p205 = scmp.eq.s32.totalorder %s26, 1
      %p206 = por %p204, %p205
      %p208 = scmp.ne.s32.totalorder %s191, %s207
      %p209 = scmp.eq.s32.totalorder %s26, 0
      %p210 = por %p208, %p209
      %p211 = scmp.le.s32.totalorder 1, %s20
      %p212 = scmp.lt.s32.totalorder %s20, 3
      %p213 = pnand %p211, %p212
      %p214 = pneg %p213
      // Predicated region
      $region9: #{tpu_custom_call.1} parent=5 // pred_check
        _
      $region10: #{tpu_custom_call.1} parent=5 // pred_check_branch
        %216 = sbr.rel (%p213) target = $region12
      $region11: #{tpu_custom_call.1} parent=5 // pred_region
        %s217 = ssub.s32 %s20, 1
        // Predicated region
        $region13: #{tpu_custom_call.1} parent=11 // pred_check
          %p218 = pneg %p93
        $region14: #{tpu_custom_call.1} parent=11 // pred_check_branch
          %220 = sbr.rel (%p218) target = $region16
        $region15: #{tpu_custom_call.1} parent=11 // pred_region
          %s222 = ssub.s32 2048, 2048
          %223 = vsyncadd [#allocation6], %s222
          %s224 = sshll.u32 [#allocation5], 4
          %s225 = int_to_ptr.vmem [resolvable:$true] %s224
          %230 = dma.hbm_to_vmem [thread:$0]  %s2, 2048, %s225, [#allocation6], 256, 256, 16
        $region16: #{tpu_custom_call.1} parent=11 // pred_fallthru
          _
        // Predicated region
        $region17: #{tpu_custom_call.1} parent=11 // pred_check
          %p231 = pneg %p114
        $region18: #{tpu_custom_call.1} parent=11 // pred_check_branch
          %233 = sbr.rel (%p231) target = $region20
        $region19: #{tpu_custom_call.1} parent=11 // pred_region
          _
        $region20: #{tpu_custom_call.1} parent=11 // pred_fallthru
          _
        // Predicated region
        $region21: #{tpu_custom_call.1} parent=11 // pred_check
          %p234 = pneg %p135
        $region22: #{tpu_custom_call.1} parent=11 // pred_check_branch
          %236 = sbr.rel (%p234) target = $region24
        $region23: #{tpu_custom_call.1} parent=11 // pred_region
          _
        $region24: #{tpu_custom_call.1} parent=11 // pred_fallthru
          _
        // Predicated region
        $region25: #{tpu_custom_call.1} parent=11 // pred_check
          %p237 = pneg %p156
        $region26: #{tpu_custom_call.1} parent=11 // pred_check_branch
          %239 = sbr.rel (%p237) target = $region28
        $region27: #{tpu_custom_call.1} parent=11 // pred_region
          _
        $region28: #{tpu_custom_call.1} parent=11 // pred_fallthru
          _
        // Predicated region
        $region29: #{tpu_custom_call.1} parent=11 // pred_check
          %p240 = pneg %p177
        $region30: #{tpu_custom_call.1} parent=11 // pred_check_branch
          %242 = sbr.rel (%p240) target = $region32
        $region31: #{tpu_custom_call.1} parent=11 // pred_region
          _
        $region32: #{tpu_custom_call.1} parent=11 // pred_fallthru
          _
      $region12: #{tpu_custom_call.1} parent=5 // pred_fallthru
        _
      %p243 = scmp.lt.s32.totalorder %s20, 2
      // Predicated region
      $region33: #{tpu_custom_call.1} parent=5 // pred_check
        %p244 = pneg %p243
      $region34: #{tpu_custom_call.1} parent=5 // pred_check_branch
        %246 = sbr.rel (%p244) target = $region36
      $region35: #{tpu_custom_call.1} parent=5 // pred_region
        // Predicated region
        $region37: #{tpu_custom_call.1} parent=35 // pred_check
          %p247 = pneg %p40
        $region38: #{tpu_custom_call.1} parent=35 // pred_check_branch
          %249 = sbr.rel (%p247) target = $region40
        $region39: #{tpu_custom_call.1} parent=35 // pred_region
          %p250 = scmp.lt.s32.totalorder %s20, 1
          %s251 = scalar_select %p250, %s20, 1
          %s252 = smul.addr %s251, 4
          %s253 = scalar_lea.vmem %s0, %s252
        $region40: #{tpu_custom_call.1} parent=35 // pred_fallthru
          _
        // Predicated region
        $region41: #{tpu_custom_call.1} parent=35 // pred_check
          %p254 = pneg %p66
        $region42: #{tpu_custom_call.1} parent=35 // pred_check_branch
          %256 = sbr.rel (%p254) target = $region44
        $region43: #{tpu_custom_call.1} parent=35 // pred_region
          %s257 = sand.u32 %s56, 1
          %s258 = scalar_lea.sflag [#allocation3], %s257
          %s259 = sand.u32 %s56, 1
          %s260 = smul.addr %s259, 8
          %s261 = scalar_lea.vmem [#allocation2], %s260
          %s263 = ssub.s32 128, 128
          %264 = vsyncadd %s258, %s263
          %s265 = smul.addr %s20, 2
          %s266 = smul.addr %s265, 64
          %s267 = scalar_lea.hbm %s1, %s266
          %s269 = sshll.u32 %s261, 4
          %s270 = int_to_ptr.vmem [resolvable:$true] %s269
          %272 = dma.hbm_to_vmem [thread:$0]  %s267, 128, %s270, %s258
        $region44: #{tpu_custom_call.1} parent=35 // pred_fallthru
          _
      $region36: #{tpu_custom_call.1} parent=5 // pred_fallthru
        _
      %p273 = scmp.le.s32.totalorder 1, %s20
      %p274 = scmp.lt.s32.totalorder %s20, 3
      %p275 = pnand %p273, %p274
      %p276 = pneg %p275
      // Predicated region
      $region45: #{tpu_custom_call.1} parent=5 // pred_check
        _
      $region46: #{tpu_custom_call.1} parent=5 // pred_check_branch
        %278 = sbr.rel (%p275) target = $region48
      $region47: #{tpu_custom_call.1} parent=5 // pred_region
        %s279 = ssub.s32 %s20, 1
        %s280 = sand.u32 %s59, 1
        %s281 = scalar_lea.sflag [#allocation3], %s280
        %s282 = sand.u32 %s59, 1
        %s283 = smul.addr %s282, 8
        %s284 = scalar_lea.vmem [#allocation2], %s283
        // Predicated region
        $region49: #{tpu_custom_call.1} parent=47 // pred_check
          %p285 = pneg %p72
        $region50: #{tpu_custom_call.1} parent=47 // pred_check_branch
          %287 = sbr.rel (%p285) target = $region52
        $region51: #{tpu_custom_call.1} parent=47 // pred_region
          %288 = dma.done %s281, 128
        $region52: #{tpu_custom_call.1} parent=47 // pred_fallthru
          _
        // Predicated region
        $region53: #{tpu_custom_call.1} parent=47 // pred_check
          %p289 = pneg %p93
        $region54: #{tpu_custom_call.1} parent=47 // pred_check_branch
          %291 = sbr.rel (%p289) target = $region56
        $region55: #{tpu_custom_call.1} parent=47 // pred_region
          %292 = dma.done [#allocation6], 2048
        $region56: #{tpu_custom_call.1} parent=47 // pred_fallthru
          _
        %p293 = scmp.lt.s32.totalorder %s25, 1
        %s294 = scalar_select %p293, %s25, 1
        %s295 = smul.addr %s294, 4
        %s296 = scalar_lea.vmem %s0, %s295
        %p297 = pneg %p46
        %p298 = pneg %p43
        %s299 = sand.u32 %s59, 1
        %s300 = scalar_lea.sflag [#allocation3], %s299
        %s301 = sand.u32 %s59, 1
        %s302 = smul.addr %s301, 8
        %s303 = scalar_lea.vmem [#allocation2], %s302
        %p304 = pneg %p72
        %p305 = pneg %p69
        %p306 = pneg %p93
        %p307 = pneg %p90
        %p308 = pneg %p114
        %p309 = pneg %p111
        %p310 = pneg %p135
        %p311 = pneg %p132
        %p312 = pneg %p156
        %p313 = pneg %p153
        %p314 = pneg %p177
        %p315 = pneg %p174
        %p316 = pneg %p203
        %p317 = pneg %p200
        %s318 = sand.u32 %s190, 1
        %s319 = scalar_lea.sflag [#allocation4], %s318
        %s320 = sand.u32 %s190, 1
        %s321 = smul.addr %s320, 8
        %s322 = scalar_lea.vmem [#allocation7], %s321
        %p323 = scmp.lt.s32.totalorder %s25, 1
        %s324 = scalar_select %p323, %s25, 1
        %s325 = smul.addr %s324, 4
        %s326 = scalar_lea.vmem %s0, %s325
        %v328 = vlaneseq
        %v329 = vand.u32 %v328, 127
        %v330 = vadd.s32 %v329, 128
        %vm331 = vcmp.lt.s32.totalorder %v329, 0
        %v332 = vsub.s32 0, %v329
        %v333 = vsel %vm331, %v332, %v329
        %v334 = vshrl.u32 %v333, 4
        %v335 = vand.u32 %v333, 15
        %v336 = vsub.s32 0, %v335
        %v337 = vsel %vm331, %v336, %v335
        %vm338 = vcmp.lt.s32.totalorder %v330, 0
        %v339 = vsub.s32 0, %v330
        %v340 = vsel %vm338, %v339, %v330
        %v341 = vshrl.u32 %v340, 4
        %v342 = vand.u32 %v340, 15
        %v343 = vsub.s32 0, %v342
        %v344 = vsel %vm338, %v343, %v342
        %vm345 = vcmp.ne.s32.totalorder %v337, 0
        %vm346 = vcmp.ne.s32.totalorder %v344, 0
        %vm347 = vcmp.lt.s32.totalorder %v337, 0
        %vm348 = vcmp.lt.s32.totalorder %v344, 0
        %vm349 = vmand %vm347, %vm345
        %vm350 = vmand %vm348, %vm346
        %v351 = vadd.s32 %v337, 16
        %v352 = vadd.s32 %v344, 16
        %v353 = vsel %vm349, %v351, %v337
        %v354 = vsel %vm350, %v352, %v344
        %vm355 = vcmp.ge.s32.totalorder %v353, 1
        %vm356 = vcmp.ge.s32.totalorder %v354, 1
        %vm357 = vcmp.lt.s32.totalorder %v353, 15
        %vm358 = vcmp.lt.s32.totalorder %v354, 15
        %v359 = vld [vmem:[%s326] sm:$0xf]
        %v360 = vld [vmem:[#allocation5] sm:$0xff]
        %v361 = vld [vmem:[#allocation5 + $0x8] sm:$0xff]
        %v362 = vld [vmem:[#allocation5 + $0x10] sm:$0xff]
        %v363 = vld [vmem:[#allocation5 + $0x18] sm:$0xff]
        %v364 = vld [vmem:[#allocation5 + $0x20] sm:$0xff]
        %v365 = vld [vmem:[#allocation5 + $0x28] sm:$0xff]
        %v366 = vld [vmem:[#allocation5 + $0x30] sm:$0xff]
        %v367 = vld [vmem:[#allocation5 + $0x38] sm:$0xff]
        %v368 = vld [vmem:[#allocation5 + $0x40] sm:$0xff]
        %v369 = vld [vmem:[#allocation5 + $0x48] sm:$0xff]
        %v370 = vld [vmem:[#allocation5 + $0x50] sm:$0xff]
        %v371 = vld [vmem:[#allocation5 + $0x58] sm:$0xff]
        %v372 = vld [vmem:[#allocation5 + $0x60] sm:$0xff]
        %v373 = vld [vmem:[#allocation5 + $0x68] sm:$0xff]
        %v374 = vld [vmem:[#allocation5 + $0x70] sm:$0xff]
        %v375 = vld [vmem:[#allocation5 + $0x78] sm:$0xff]
        %vm376 = vcmask 523264
        %v378 = vsel %vm376, %v359, 0
        %380 = vmatprep.subr.mxu0 %v361
        %381 = vmatpush1.msra.mxu0 %v360
        %382 = vmatprep.subr.mxu0 %v363
        %383 = vmatpush1.msra.mxu0 %v362
        %384 = vmatprep.subr.mxu0 %v365
        %385 = vmatpush1.msra.mxu0 %v364
        %386 = vmatprep.subr.mxu0 %v367
        %387 = vmatpush1.msra.mxu0 %v366
        %388 = vmatprep.subr.mxu0 %v369
        %389 = vmatpush1.msra.mxu0 %v368
        %390 = vmatprep.subr.mxu0 %v371
        %391 = vmatpush1.msra.mxu0 %v370
        %392 = vmatprep.subr.mxu0 %v373
        %393 = vmatpush1.msra.mxu0 %v372
        %394 = vmatprep.subr.mxu0 %v375
        %395 = vmatpush1.msra.mxu0 %v374
        %396 = vmatprep.subr.mxu0 0.0
        %397 = vmatpush1.msra.mxu0 0.0
        %398 = vmatprep.subr.mxu0 0.0
        %399 = vmatpush1.msra.mxu0 0.0
        %400 = vmatprep.subr.mxu0 0.0
        %401 = vmatpush1.msra.mxu0 0.0
        %402 = vmatprep.subr.mxu0 0.0
        %403 = vmatpush1.msra.mxu0 0.0
        %404 = vmatprep.subr.mxu0 0.0
        %405 = vmatpush1.msra.mxu0 0.0
        %406 = vmatprep.subr.mxu0 0.0
        %407 = vmatpush1.msra.mxu0 0.0
        %408 = vmatprep.subr.mxu0 0.0
        %409 = vmatpush1.msra.mxu0 0.0
        %410 = vmatprep.subr.mxu0 0.0
        %411 = vmatpush1.msra.mxu0 0.0
        %412 = vmatprep.subr.mxu0 0.0
        %413 = vmatpush1.msra.mxu0 0.0
        %414 = vmatprep.subr.mxu0 0.0
        %415 = vmatpush1.msra.mxu0 0.0
        %416 = vmatprep.subr.mxu0 0.0
        %417 = vmatpush1.msra.mxu0 0.0
        %418 = vmatprep.subr.mxu0 0.0
        %419 = vmatpush1.msra.mxu0 0.0
        %420 = vmatprep.subr.mxu0 0.0
        %421 = vmatpush1.msra.mxu0 0.0
        %422 = vmatprep.subr.mxu0 0.0
        %423 = vmatpush1.msra.mxu0 0.0
        %424 = vmatprep.subr.mxu0 0.0
        %425 = vmatpush1.msra.mxu0 0.0
        %426 = vmatprep.subr.mxu0 0.0
        %427 = vmatpush1.msra.mxu0 0.0
        %428 = vmatprep.subr.mxu0 0.0
        %429 = vmatpush1.msra.mxu0 0.0
        %430 = vmatprep.subr.mxu0 0.0
        %431 = vmatpush1.msra.mxu0 0.0
        %432 = vmatprep.subr.mxu0 0.0
        %433 = vmatpush1.msra.mxu0 0.0
        %434 = vmatprep.subr.mxu0 0.0
        %435 = vmatpush1.msra.mxu0 0.0
        %436 = vmatprep.subr.mxu0 0.0
        %437 = vmatpush1.msra.mxu0 0.0
        %438 = vmatprep.subr.mxu0 0.0
        %439 = vmatpush1.msra.mxu0 0.0
        %440 = vmatprep.subr.mxu0 0.0
        %441 = vmatpush1.msra.mxu0 0.0
        %442 = vmatprep.subr.mxu0 0.0
        %443 = vmatpush1.msra.mxu0 0.0
        %444 = vmatprep.mubr.f32.mxu0 0.0
        %445 = vmatmul.mubr.f32.gmra.mrb[0].mxu0 %v378
        %v446 = vpop.f32.mrb[0].mxu0
        %v447 = vadd.f32 0.0, %v446
        %v448 = vpop.f32.mrb[0].mxu0
        %v449 = vadd.f32 0.0, %v448
        %450 = vdwg.mxu0
        %v451 = vld [vmem:[%s284] sm:$0xff]
        %v453 = vcombine.high %v451, %v451
        %v457 = vrot.slane %v447, 4
        %v458 = vrot.slane %v449, 4
        %vm461 = vcmask 1043456
        %v462 = vsel %vm461, %v451, %v457
        %v463 = vsel %vm461, %v453, %v458
        %v464 = vld [vmem:[%s3] sm:$0x3]
        %467 = vrot.lane.b32.xlu0 %v462, 17
        %v468 = vpop.permute.xlu0 %467
        %469 = vrot.lane.b32.xlu0 %v463, 17
        %v470 = vpop.permute.xlu0 %469
        %vm471 = vcmask 138240
        %v472 = vsel %vm471, %v468, %v470
        %v475 = vsel %vm471, 0.0, %v468
        %v476 = vsel %vm355, 1, 0
        %v477 = vsel %vm356, 1, 0
        %vm478 = vcmp.eq.s32.totalorder %v476, 1
        %vm479 = vcmp.eq.s32.totalorder %v477, 1
        %v480 = vsel %vm478, %v475, 0.0
        %v481 = vsel %vm479, %v472, 0.0
        %482 = vrot.lane.b32.xlu0 %v462, 16
        %v483 = vpop.permute.xlu0 %482
        %484 = vrot.lane.b32.xlu0 %v463, 16
        %v485 = vpop.permute.xlu0 %484
        %vm486 = vcmask 130048
        %v487 = vsel %vm486, %v483, %v485
        %v490 = vsel %vm486, 0.0, %v483
        %491 = vrot.lane.b32.xlu0 %v462, 15
        %v492 = vpop.permute.xlu0 %491
        %493 = vrot.lane.b32.xlu0 %v463, 15
        %v494 = vpop.permute.xlu0 %493
        %vm495 = vcmask 121856
        %v496 = vsel %vm495, %v492, %v494
        %v499 = vsel %vm495, 0.0, %v492
        %v500 = vsel %vm357, 1, 0
        %v501 = vsel %vm358, 1, 0
        %vm502 = vcmp.eq.s32.totalorder %v500, 1
        %vm503 = vcmp.eq.s32.totalorder %v501, 1
        %v504 = vsel %vm502, %v499, 0.0
        %v505 = vsel %vm503, %v496, 0.0
        %506 = vrot.lane.b32.xlu0 %v462, 1
        %v507 = vpop.permute.xlu0 %506
        %508 = vrot.lane.b32.xlu0 %v463, 1
        %v509 = vpop.permute.xlu0 %508
        %vm510 = vcmask 7168
        %v511 = vsel %vm510, %v507, %v509
        %v514 = vsel %vm510, 0.0, %v507
        %v515 = vsel %vm478, %v514, 0.0
        %v516 = vsel %vm479, %v511, 0.0
        %517 = vrot.lane.b32.xlu0 %v462, 127
        %v518 = vpop.permute.xlu0 %517
        %519 = vrot.lane.b32.xlu0 %v463, 127
        %v520 = vpop.permute.xlu0 %519
        %vm521 = vcmask 1039360
        %v522 = vsel %vm521, %v518, %v520
        %v525 = vsel %vm521, %v520, 0.0
        %v526 = vsel %vm502, %v522, 0.0
        %v527 = vsel %vm503, %v525, 0.0
        %528 = vrot.lane.b32.xlu0 %v462, 113
        %v529 = vpop.permute.xlu0 %528
        %530 = vrot.lane.b32.xlu0 %v463, 113
        %v531 = vpop.permute.xlu0 %530
        %vm532 = vcmask 924672
        %v533 = vsel %vm532, %v529, %v531
        %v536 = vsel %vm532, %v531, 0.0
        %v537 = vsel %vm478, %v533, 0.0
        %v538 = vsel %vm479, %v536, 0.0
        %539 = vrot.lane.b32.xlu0 %v462, 112
        %v540 = vpop.permute.xlu0 %539
        %541 = vrot.lane.b32.xlu0 %v463, 112
        %v542 = vpop.permute.xlu0 %541
        %vm543 = vcmask 916480
        %v544 = vsel %vm543, %v540, %v542
        %v547 = vsel %vm543, %v542, 0.0
        %548 = vrot.lane.b32.xlu0 %v462, 111
        %v549 = vpop.permute.xlu0 %548
        %550 = vrot.lane.b32.xlu0 %v463, 111
        %v551 = vpop.permute.xlu0 %550
        %vm552 = vcmask 908288
        %v553 = vsel %vm552, %v549, %v551
        %v556 = vsel %vm552, %v551, 0.0
        %v557 = vsel %vm502, %v553, 0.0
        %v558 = vsel %vm503, %v556, 0.0
        %v559 = vpack.c.bf16 %v490, %v480
        %v560 = vpack.c.bf16 %v487, %v481
        %v561 = vpack.c.bf16 %v515, %v504
        %v562 = vpack.c.bf16 %v516, %v505
        %v563 = vpack.c.bf16 %v526, %v462
        %v564 = vpack.c.bf16 %v527, %v463
        %v565 = vpack.c.bf16 %v544, %v537
        %v566 = vpack.c.bf16 %v547, %v538
        %v567 = vpack.c.bf16 %v557, %v557
        %v568 = vpack.c.bf16 %v558, %v558
        %v569 = vld [vmem:[%s4] sm:$0xf]
        %571 = vset.pattern.permute.xlu0 0
        %572 = vperm.xlu0 %571, %v569
        %v573 = vpop.permute.xlu0 %572
        %vm575 = vcmask 588800
        %v577 = vsel %vm575, %v464, 0
        %v580 = vsel %vm461, %v567, 0
        %v583 = vsel %vm461, %v568, 0
        %585 = vmatprep.subr.bf16.mxu0 %v560
        %586 = vmatpush1.bf16.msra.mxu0 %v559
        %587 = vmatprep.subr.bf16.mxu0 %v562
        %588 = vmatpush1.bf16.msra.mxu0 %v561
        %589 = vmatprep.subr.bf16.mxu0 %v564
        %590 = vmatpush1.bf16.msra.mxu0 %v563
        %591 = vmatprep.subr.bf16.mxu0 %v566
        %592 = vmatpush1.bf16.msra.mxu0 %v565
        %593 = vmatprep.subr.bf16.mxu0 %v583
        %594 = vmatpush1.bf16.msra.mxu0 %v580
        %595 = vmatprep.subr.bf16.mxu0 0
        %596 = vmatpush1.bf16.msra.mxu0 0
        %597 = vmatprep.subr.bf16.mxu0 0
        %598 = vmatpush1.bf16.msra.mxu0 0
        %599 = vmatprep.subr.bf16.mxu0 0
        %600 = vmatpush1.bf16.msra.mxu0 0
        %601 = vmatprep.subr.bf16.mxu0 0
        %602 = vmatpush1.bf16.msra.mxu0 0
        %603 = vmatprep.subr.bf16.mxu0 0
        %604 = vmatpush1.bf16.msra.mxu0 0
        %605 = vmatprep.subr.bf16.mxu0 0
        %606 = vmatpush1.bf16.msra.mxu0 0
        %607 = vmatprep.subr.bf16.mxu0 0
        %608 = vmatpush1.bf16.msra.mxu0 0
        %609 = vmatprep.subr.bf16.mxu0 0
        %610 = vmatpush1.bf16.msra.mxu0 0
        %611 = vmatprep.subr.bf16.mxu0 0
        %612 = vmatpush1.bf16.msra.mxu0 0
        %613 = vmatprep.subr.bf16.mxu0 0
        %614 = vmatpush1.bf16.msra.mxu0 0
        %615 = vmatprep.subr.bf16.mxu0 0
        %616 = vmatpush1.bf16.msra.mxu0 0
        %617 = vmatprep.mubr.bf16.mxu0 0
        %618 = vmatmul.mubr.bf16.gmra.mrb[0].mxu0 %v577
        %v619 = vpop.f32.mrb[0].mxu0
        %v620 = vadd.f32 %v573, %v619
        %v621 = vpop.f32.mrb[0].mxu0
        %v622 = vadd.f32 %v573, %v621
        %v623 = vpop.f32.mrb[0].mxu0
        %v624 = vpop.f32.mrb[0].mxu0
        %625 = vdwg.mxu0
        %v626 = vmax.f32 %v620, 0.0
        %v627 = vmax.f32 %v622, 0.0
        %v628 = vld [vmem:[%s5] sm:$0x3]
        %631 = vrot.lane.b32.xlu0 %v626, 17
        %v632 = vpop.permute.xlu0 %631
        %633 = vrot.lane.b32.xlu0 %v627, 17
        %v634 = vpop.permute.xlu0 %633
        %v635 = vsel %vm471, %v632, %v634
        %v638 = vsel %vm471, 0.0, %v632
        %v639 = vsel %vm478, %v638, 0.0
        %v640 = vsel %vm479, %v635, 0.0
        %641 = vrot.lane.b32.xlu0 %v626, 16
        %v642 = vpop.permute.xlu0 %641
        %643 = vrot.lane.b32.xlu0 %v627, 16
        %v644 = vpop.permute.xlu0 %643
        %v645 = vsel %vm486, %v642, %v644
        %v647 = vsel %vm486, 0.0, %v642
        %648 = vrot.lane.b32.xlu0 %v626, 15
        %v649 = vpop.permute.xlu0 %648
        %650 = vrot.lane.b32.xlu0 %v627, 15
        %v651 = vpop.permute.xlu0 %650
        %v652 = vsel %vm495, %v649, %v651
        %v655 = vsel %vm495, 0.0, %v649
        %v656 = vsel %vm502, %v655, 0.0
        %v657 = vsel %vm503, %v652, 0.0
        %658 = vrot.lane.b32.xlu0 %v626, 1
        %v659 = vpop.permute.xlu0 %658
        %660 = vrot.lane.b32.xlu0 %v627, 1
        %v661 = vpop.permute.xlu0 %660
        %v662 = vsel %vm510, %v659, %v661
        %v665 = vsel %vm510, 0.0, %v659
        %v666 = vsel %vm478, %v665, 0.0
        %v667 = vsel %vm479, %v662, 0.0
        %668 = vrot.lane.b32.xlu0 %v626, 127
        %v669 = vpop.permute.xlu0 %668
        %670 = vrot.lane.b32.xlu0 %v627, 127
        %v671 = vpop.permute.xlu0 %670
        %v672 = vsel %vm521, %v669, %v671
        %v675 = vsel %vm521, %v671, 0.0
        %v676 = vsel %vm502, %v672, 0.0
        %v677 = vsel %vm503, %v675, 0.0
        %678 = vrot.lane.b32.xlu0 %v626, 113
        %v679 = vpop.permute.xlu0 %678
        %680 = vrot.lane.b32.xlu0 %v627, 113
        %v681 = vpop.permute.xlu0 %680
        %v682 = vsel %vm532, %v679, %v681
        %v685 = vsel %vm532, %v681, 0.0
        %v686 = vsel %vm478, %v682, 0.0
        %v687 = vsel %vm479, %v685, 0.0
        %688 = vrot.lane.b32.xlu0 %v626, 112
        %v689 = vpop.permute.xlu0 %688
        %690 = vrot.lane.b32.xlu0 %v627, 112
        %v691 = vpop.permute.xlu0 %690
        %v692 = vsel %vm543, %v689, %v691
        %v694 = vsel %vm543, %v691, 0.0
        %695 = vrot.lane.b32.xlu0 %v626, 111
        %v696 = vpop.permute.xlu0 %695
        %697 = vrot.lane.b32.xlu0 %v627, 111
        %v698 = vpop.permute.xlu0 %697
        %v699 = vsel %vm552, %v696, %v698
        %v702 = vsel %vm552, %v698, 0.0
        %v703 = vsel %vm502, %v699, 0.0
        %v704 = vsel %vm503, %v702, 0.0
        %v706 = vrot.slane %v647, 4
        %v707 = vrot.slane %v645, 4
        %v712 = vrot.slane %v666, 4
        %v713 = vrot.slane %v667, 4
        %v718 = vrot.slane %v676, 4
        %v719 = vrot.slane %v677, 4
        %v723 = vrot.slane %v692, 4
        %v724 = vrot.slane %v694, 4
        %v727 = vsel %vm461, %v639, %v706
        %v728 = vsel %vm461, %v640, %v707
        %v729 = vsel %vm461, %v656, %v712
        %v730 = vsel %vm461, %v657, %v713
        %v731 = vsel %vm461, %v626, %v718
        %v732 = vsel %vm461, %v627, %v719
        %v733 = vsel %vm461, %v686, %v723
        %v734 = vsel %vm461, %v687, %v724
        %v735 = vpack.c.bf16 %v729, %v727
        %v736 = vpack.c.bf16 %v730, %v728
        %v737 = vpack.c.bf16 %v733, %v731
        %v738 = vpack.c.bf16 %v734, %v732
        %v739 = vpack.c.bf16 %v703, %v703
        %v740 = vpack.c.bf16 %v704, %v704
        %v741 = vld [vmem:[%s6] sm:$0xf]
        %743 = vset.pattern.permute.xlu0 0
        %744 = vperm.xlu0 %743, %v741
        %v745 = vpop.permute.xlu0 %744
        %vm747 = vcmask 293888
        %v749 = vsel %vm747, %v628, 0
        %vm751 = vcmask 1041408
        %v753 = vsel %vm751, %v739, 0
        %v756 = vsel %vm751, %v740, 0
        %758 = vmatprep.subr.bf16.mxu0 %v736
        %759 = vmatpush1.bf16.msra.mxu0 %v735
        %760 = vmatprep.subr.bf16.mxu0 %v738
        %761 = vmatpush1.bf16.msra.mxu0 %v737
        %762 = vmatprep.subr.bf16.mxu0 %v756
        %763 = vmatpush1.bf16.msra.mxu0 %v753
        %764 = vmatprep.subr.bf16.mxu0 0
        %765 = vmatpush1.bf16.msra.mxu0 0
        %766 = vmatprep.subr.bf16.mxu0 0
        %767 = vmatpush1.bf16.msra.mxu0 0
        %768 = vmatprep.subr.bf16.mxu0 0
        %769 = vmatpush1.bf16.msra.mxu0 0
        %770 = vmatprep.subr.bf16.mxu0 0
        %771 = vmatpush1.bf16.msra.mxu0 0
        %772 = vmatprep.subr.bf16.mxu0 0
        %773 = vmatpush1.bf16.msra.mxu0 0
        %774 = vmatprep.subr.bf16.mxu0 0
        %775 = vmatpush1.bf16.msra.mxu0 0
        %776 = vmatprep.subr.bf16.mxu0 0
        %777 = vmatpush1.bf16.msra.mxu0 0
        %778 = vmatprep.subr.bf16.mxu0 0
        %779 = vmatpush1.bf16.msra.mxu0 0
        %780 = vmatprep.subr.bf16.mxu0 0
        %781 = vmatpush1.bf16.msra.mxu0 0
        %782 = vmatprep.subr.bf16.mxu0 0
        %783 = vmatpush1.bf16.msra.mxu0 0
        %784 = vmatprep.subr.bf16.mxu0 0
        %785 = vmatpush1.bf16.msra.mxu0 0
        %786 = vmatprep.subr.bf16.mxu0 0
        %787 = vmatpush1.bf16.msra.mxu0 0
        %788 = vmatprep.subr.bf16.mxu0 0
        %789 = vmatpush1.bf16.msra.mxu0 0
        %790 = vmatprep.mubr.bf16.mxu0 0
        %791 = vmatmul.mubr.bf16.gmra.mrb[0].mxu0 %v749
        %v792 = vpop.f32.mrb[0].mxu0
        %v793 = vadd.f32 %v745, %v792
        %v794 = vpop.f32.mrb[0].mxu0
        %v795 = vadd.f32 %v745, %v794
        %v796 = vpop.f32.mrb[0].mxu0
        %v797 = vpop.f32.mrb[0].mxu0
        %798 = vdwg.mxu0
        %v799 = vmax.f32 %v793, 0.0
        %v800 = vmax.f32 %v795, 0.0
        %v803 = vcombine.low %v799, %v800
        %805 = vst [vmem:[%s322] sm:$0xff] %v803
        %s806 = sand.u32 %s190, 1
        %s807 = scalar_lea.sflag [#allocation4], %s806
        %s808 = sand.u32 %s190, 1
        %s809 = smul.addr %s808, 8
        %s810 = scalar_lea.vmem [#allocation7], %s809
        // Predicated region
        $region57: #{tpu_custom_call.1} parent=47 // pred_check
          %p811 = pneg %p200
        $region58: #{tpu_custom_call.1} parent=47 // pred_check_branch
          %813 = sbr.rel (%p811) target = $region60
        $region59: #{tpu_custom_call.1} parent=47 // pred_region
          %s815 = ssub.s32 128, 128
          %816 = vsyncadd %s807, %s815
          %s817 = smul.addr %s25, 2
          %s818 = smul.addr %s817, 64
          %s819 = scalar_lea.hbm %s7, %s818
          %s821 = sshll.u32 %s810, 4
          %s822 = int_to_ptr.vmem [resolvable:$true] %s821
          %824 = dma.vmem_to_hbm [thread:$0]  %s822, 128, %s819, %s807
        $region60: #{tpu_custom_call.1} parent=47 // pred_fallthru
          _
      $region48: #{tpu_custom_call.1} parent=5 // pred_fallthru
        _
      %p825 = scmp.le.s32.totalorder 2, %s20
      // Predicated region
      $region61: #{tpu_custom_call.1} parent=5 // pred_check
        %p826 = pneg %p825
      $region62: #{tpu_custom_call.1} parent=5 // pred_check_branch
        %828 = sbr.rel (%p826) target = $region64
      $region63: #{tpu_custom_call.1} parent=5 // pred_region
        %s829 = ssub.s32 %s20, 2
        // Predicated region
        $region65: #{tpu_custom_call.1} parent=63 // pred_check
          %p830 = pneg %p206
        $region66: #{tpu_custom_call.1} parent=63 // pred_check_branch
          %832 = sbr.rel (%p830) target = $region68
        $region67: #{tpu_custom_call.1} parent=63 // pred_region
          %s833 = sand.u32 %s191, 1
          %s834 = scalar_lea.sflag [#allocation4], %s833
          %s835 = sand.u32 %s191, 1
          %s836 = smul.addr %s835, 8
          %s837 = scalar_lea.vmem [#allocation7], %s836
          %838 = dma.done %s834, 128
        $region68: #{tpu_custom_call.1} parent=63 // pred_fallthru
          _
      $region64: #{tpu_custom_call.1} parent=5 // pred_fallthru
        _
    $region6: #{tpu_custom_call.1} parent=1 // loop_footer
      %s24 = sadd.s32 1, %s20
    $region7: #{tpu_custom_call.1} parent=1 // loop_footer_branch
      %19 = sbr.rel target = $region3
    $region8: #{tpu_custom_call.1} parent=1 // loop_exit
      _
    %839 = vsyncpa [#allocation3], 1
    %s840 = scalar_lea.sflag [#allocation3], 1
    %841 = vsyncpa %s840, 1
    %842 = vsyncpa [#allocation6], 1
    %843 = vsyncpa [#allocation4], 1
    %s844 = scalar_lea.sflag [#allocation4], 1
    %845 = vsyncpa %s844, 1

</llo_original>
